<compile_context>
chip_gen: v5e
topology: v5e:2x2
jax: 0.10.0
libtpu: 0.0.40
codegen_flags: <defaults>
</compile_context>

<pallas_src>
import functools

import jax
import jax.numpy as jnp
from jax.experimental import pallas as pl
from jax.experimental.pallas import tpu as pltpu

ALPHA = 8.0
GAMMA = 1.0

_LANES = 128
_MAX_BLOCK_ROWS = 8192                 # (8192, 128) f32 block = 4 MiB per input buffer
_VMEM_LIMIT_BYTES = 32 * 1024 * 1024   # 2 inputs x 2 buffers x 4 MiB + headroom


def _round_up(x, m):
    return ((x + m - 1) // m) * m


@functools.lru_cache(maxsize=1)
def _tensorcores_per_chip():
    """Best-effort count of TensorCores behind one JAX device (v7x: 2)."""
    try:
        dev = jax.devices()[0]
        if getattr(dev, "platform", "") != "tpu":
            return 1
        for attr in ("num_cores", "core_count", "num_tensorcores"):
            v = getattr(dev, attr, None)
            if isinstance(v, int) and 1 <= v <= 8:
                return min(int(v), 2)
        kind = str(getattr(dev, "device_kind", "")).lower()
        if "v7" in kind:
            return 2
    except Exception:  # defensive: never fail the loss over a device query
        pass
    return 1


def _focal_weight(err, alpha, gamma):
    """(1 - exp(-alpha*err))**gamma, gamma specialized at trace time."""
    w = 1.0 - jnp.exp(err * jnp.float32(-alpha))
    if gamma == 1.0:      # default path: single EUP transcendental per element
        return w
    if gamma == 2.0:
        return w * w
    return jnp.power(w, jnp.float32(gamma))


def _focal_sum_jnp(pred, true, alpha, gamma):
    """Plain-jnp partial sum (tail / tiny inputs)."""
    err = jnp.abs(true.astype(jnp.float32) - pred.astype(jnp.float32))
    return jnp.sum(_focal_weight(err, alpha, gamma) * err * err)


def _focal_mse_kernel(pred_ref, true_ref, out_ref, acc_ref, *,
                      alpha, gamma, valid_rows, block_rows, acc_rows,
                      bps, need_mask):
    p = pl.program_id(0)     # TensorCore slice axis ("parallel")
    i = pl.program_id(1)     # reduction step within the slice ("arbitrary")

    @pl.when(i == 0)
    def _init():
        acc_ref[...] = jnp.zeros_like(acc_ref)

    pred = pred_ref[...].astype(jnp.float32)
    true = true_ref[...].astype(jnp.float32)
    err = jnp.abs(true - pred)
    contrib = _focal_weight(err, alpha, gamma) * (err * err)

    groups = block_rows // acc_rows

    def _fold(x):
        # (block_rows,128) -> (acc_rows,128); acc_rows % 8 == 0 so the reshape
        # is layout-free and the sum is pure vreg adds.
        return x.reshape(groups, acc_rows, _LANES).sum(axis=0)

    if need_mask:
        # There are no clamped/duplicate blocks by construction (num_slices*bps
        # == num_blocks), so the only block needing a mask is the trailing
        # partial one; all other steps take the unmasked fast path.
        blk = p * bps + i
        edge = (blk + 1) * block_rows > valid_rows

        @pl.when(jnp.logical_not(edge))
        def _accumulate_fast():
            acc_ref[...] += _fold(contrib)

        @pl.when(edge)
        def _accumulate_masked():
            row = blk * block_rows + jax.lax.broadcasted_iota(
                jnp.int32, (block_rows, _LANES), 0)
            acc_ref[...] += _fold(
                jnp.where(row < valid_rows, contrib, jnp.float32(0.0)))
    else:
        acc_ref[...] += _fold(contrib)

    @pl.when(i == pl.num_programs(1) - 1)
    def _finalize():
        out_ref[...] = acc_ref[...]


def focal_mse_loss(y_pred, y_true, alpha=ALPHA, gamma=GAMMA,
                   regular_type=None, regular_lambda=1e-5, params=None,
                   max_block_rows=_MAX_BLOCK_ROWS):
    """Focal MSE loss (mean over all elements); the hot path runs in Pallas."""
    assert y_pred.shape == y_true.shape, (y_pred.shape, y_true.shape)
    n = int(y_pred.size)
    alpha = float(alpha)
    gamma = float(gamma)
    max_block_rows = max(8, (int(max_block_rows) // 8) * 8)

    pred_flat = y_pred.reshape(-1)
    true_flat = y_true.reshape(-1)

    rows = n // _LANES            # full 128-wide rows (no host padding)
    prefix = rows * _LANES        # elements handled by the kernel
    total = jnp.float32(0.0)

    if rows >= 8:
        if prefix == n:           # free reshape, no copy
            pred2d = pred_flat.reshape(rows, _LANES)
            true2d = true_flat.reshape(rows, _LANES)
        else:                     # 128-aligned prefix; tail handled below
            pred2d = pred_flat[:prefix].reshape(rows, _LANES)
            true2d = true_flat[:prefix].reshape(rows, _LANES)

        # ---- tiling -------------------------------------------------------
        num_slices = 1
        block_rows = min(max_block_rows, (rows // 8) * 8)
        num_blocks = pl.cdiv(rows, block_rows)
        bps = num_blocks

        if _tensorcores_per_chip() >= 2 and rows >= 16:
            # v7x: split blocks evenly across the two TensorCores.  Only use the
            # split when the block count comes out even, so there is never a
            # duplicate (clamped) block and no extra masking.
            target = 2 * pl.cdiv(pl.cdiv(rows, max_block_rows), 2)
            br2 = min(max_block_rows, _round_up(pl.cdiv(rows, target), 8))
            nb2 = pl.cdiv(rows, br2)
            if nb2 % 2 == 0:
                num_slices, block_rows, num_blocks, bps = 2, br2, nb2, nb2 // 2

        # Pallas fills the trailing partial block with garbage; mask only there.
        need_mask = (num_blocks * block_rows) != rows

        # Small accumulator: 1-4 vregs (largest of 32/16/8 dividing block_rows).
        acc_rows = next(r for r in (32, 16, 8) if block_rows % r == 0)

        kernel = functools.partial(
            _focal_mse_kernel, alpha=alpha, gamma=gamma, valid_rows=rows,
            block_rows=block_rows, acc_rows=acc_rows, bps=bps,
            need_mask=need_mask)

        partials = pl.pallas_call(
            kernel,
            out_shape=jax.ShapeDtypeStruct((num_slices * acc_rows, _LANES),
                                           jnp.float32),
            grid_spec=pltpu.PrefetchScalarGridSpec(
                num_scalar_prefetch=0,
                grid=(num_slices, bps),
                in_specs=[
                    pl.BlockSpec((block_rows, _LANES),
                                 lambda p, i: (p * bps + i, 0)),
                    pl.BlockSpec((block_rows, _LANES),
                                 lambda p, i: (p * bps + i, 0)),
                ],
                out_specs=pl.BlockSpec((acc_rows, _LANES), lambda p, i: (p, 0)),
                scratch_shapes=[pltpu.VMEM((acc_rows, _LANES), jnp.float32)],
            ),
            compiler_params=pltpu.CompilerParams(
                dimension_semantics=("parallel", "arbitrary"),
                vmem_limit_bytes=_VMEM_LIMIT_BYTES,
            ),
        )(pred2d, true2d)
        total = total + jnp.sum(partials)
    else:
        prefix = 0  # tiny input: not worth a kernel launch, do it all in jnp

    if prefix < n:
        # <128-element tail (or tiny input) in plain jnp: avoids the host-side
        # zero-pad concatenate (a full extra HBM read+write of both inputs).
        total = total + _focal_sum_jnp(pred_flat[prefix:], true_flat[prefix:],
                                       alpha, gamma)

    loss = total / jnp.float32(n)

    if regular_type and params is not None:
        # TODO(synk): regularization over model.parameters() needs a model
        # object; only this explicit-params path is provided.
        if regular_type == 'L1':
            reg = sum(jnp.sum(jnp.abs(p)) for p in params)
        elif regular_type == 'L2':
            reg = sum(jnp.sum(p * p) for p in params)
        elif regular_type == 'L1+L2':
            reg = sum(jnp.sum(jnp.abs(p)) + jnp.sum(p * p) for p in params)
        else:
            raise ValueError(f'Unsupported regularization type: {regular_type}')
        return loss + regular_lambda * reg
    return loss


def _reference(y_pred, y_true, alpha=ALPHA, gamma=GAMMA):
    err = jnp.abs(y_true.astype(jnp.float32) - y_pred.astype(jnp.float32))
    w = (1.0 - jnp.exp(-alpha * err)) ** gamma
    return jnp.mean(w * err * err)


if __name__ == "__main__":
    keys = jax.random.split(jax.random.PRNGKey(0), 8)

    # 1) NCHW shape typical for the module (numel % 128 == 0, single block).
    yp = jax.random.normal(keys[0], (2, 4, 16, 16), dtype=jnp.float32)
    yt = jax.random.normal(keys[1], (2, 4, 16, 16), dtype=jnp.float32)
    out = jax.block_until_ready(focal_mse_loss(yp, yt))
    ref = _reference(yp, yt)
    assert jnp.allclose(out, ref, rtol=1e-5, atol=1e-6), (out, ref)

    # 2) Ragged element count: partial trailing block (gated in-kernel mask)
    #    plus a <128-element tail handled in plain jnp.
    yp = jax.random.normal(keys[2], (3, 5, 33, 17), dtype=jnp.float32)
    yt = jax.random.normal(keys[3], (3, 5, 33, 17), dtype=jnp.float32)
    out = jax.block_until_ready(focal_mse_loss(yp, yt, max_block_rows=32))
    ref = _reference(yp, yt)
    assert jnp.allclose(out, ref, rtol=1e-5, atol=1e-6), (out, ref)

    # 3) Multi-block accumulation over the reduction axis (small block override).
    yp = jax.random.normal(keys[4], (8, 16, 64, 64), dtype=jnp.float32)
    yt = jax.random.normal(keys[5], (8, 16, 64, 64), dtype=jnp.float32)
    out = jax.block_until_ready(focal_mse_loss(yp, yt, max_block_rows=1024))
    ref = _reference(yp, yt)
    assert jnp.allclose(out, ref, rtol=1e-5, atol=1e-6), (out, ref)

    # 4) bf16 inputs (in-kernel cast), gamma=2 branch, explicit L2 penalty path.
    yp = jax.random.normal(keys[6], (2, 4, 16, 16), dtype=jnp.bfloat16)
    yt = jax.random.normal(keys[7], (2, 4, 16, 16), dtype=jnp.bfloat16)
    reg_params = [jnp.ones((4, 4), jnp.float32)]
    out = jax.block_until_ready(
        focal_mse_loss(yp, yt, gamma=2.0, regular_type='L2', params=reg_params))
    ref = _reference(yp, yt, gamma=2.0) + 1e-5 * jnp.sum(reg_params[0] ** 2)
    assert jnp.allclose(out, ref, rtol=1e-4, atol=1e-5), (out, ref)

    print("KERNEL_OK")
</pallas_src>

<mosaic_0001>
module attributes {stable_mosaic.version = 11 : i64} {
  func.func @_focal_mse_kernel(%arg0: i32, %arg1: i32, %arg2: memref<16x128xf32, #tpu.memory_space<vmem>>, %arg3: memref<16x128xf32, #tpu.memory_space<vmem>>, %arg4: memref<16x128xf32, #tpu.memory_space<vmem>>, %arg5: memref<16x128xf32, #tpu.memory_space<vmem>>) attributes {dimension_semantics = [#tpu.dimension_semantics<parallel>, #tpu.dimension_semantics<arbitrary>], iteration_bounds = array<i64: 1, 1>, scalar_prefetch = 0 : i64, scratch_operands = 1 : i64, tpu.core_type = #tpu.core_type<tc>, window_params = [{transform_indices = @transform_0, window_bounds = array<i64: 16, 128>}, {transform_indices = @transform_1, window_bounds = array<i64: 16, 128>}, {transform_indices = @transform_2, window_bounds = array<i64: 16, 128>}]} {
    %c0_i32 = arith.constant 0 : i32
    %0 = arith.cmpi eq, %arg1, %c0_i32 : i32
    %1 = arith.extui %0 : i1 to i32
    %c0_i32_0 = arith.constant 0 : i32
    %2 = arith.cmpi ne, %1, %c0_i32_0 : i32
    scf.if %2 {
      %cst_12 = arith.constant 0.000000e+00 : f32
      %22 = vector.broadcast %cst_12 : f32 to vector<16x128xf32>
      %c0_13 = arith.constant 0 : index
      %c0_14 = arith.constant 0 : index
      %23 = vector.load %arg5[%c0_13, %c0_14] : memref<16x128xf32, #tpu.memory_space<vmem>>, vector<16x128xf32>
      tpu.vector_store %arg5[%c0_13, %c0_14], %22 {strides = array<i32>} : memref<16x128xf32, #tpu.memory_space<vmem>>, vector<16x128xf32>,
    } else {
    }
    %c0 = arith.constant 0 : index
    %c0_1 = arith.constant 0 : index
    %3 = vector.load %arg2[%c0, %c0_1] : memref<16x128xf32, #tpu.memory_space<vmem>>, vector<16x128xf32>
    %c0_2 = arith.constant 0 : index
    %c0_3 = arith.constant 0 : index
    %4 = vector.load %arg3[%c0_2, %c0_3] : memref<16x128xf32, #tpu.memory_space<vmem>>, vector<16x128xf32>
    %5 = arith.subf %4, %3 : vector<16x128xf32>
    %6 = math.absf %5 : vector<16x128xf32>
    %cst = arith.constant -8.000000e+00 : f32
    %7 = vector.broadcast %cst : f32 to vector<16x128xf32>
    %8 = arith.mulf %6, %7 : vector<16x128xf32>
    %9 = math.exp %8 : vector<16x128xf32>
    %cst_4 = arith.constant 1.000000e+00 : f32
    %10 = vector.broadcast %cst_4 : f32 to vector<16x128xf32>
    %11 = arith.subf %10, %9 : vector<16x128xf32>
    %12 = arith.mulf %6, %6 : vector<16x128xf32>
    %13 = arith.mulf %11, %12 : vector<16x128xf32>
    %c0_5 = arith.constant 0 : index
    %c0_6 = arith.constant 0 : index
    %14 = vector.load %arg5[%c0_5, %c0_6] : memref<16x128xf32, #tpu.memory_space<vmem>>, vector<16x128xf32>
    %15 = vector.shape_cast %13 : vector<16x128xf32> to vector<1x16x128xf32>
    %cst_7 = arith.constant dense<0.000000e+00> : vector<16x128xf32>
    %16 = vector.multi_reduction <add>, %15, %cst_7 [0] : vector<1x16x128xf32> to vector<16x128xf32>
    %17 = arith.addf %14, %16 : vector<16x128xf32>
    %c0_8 = arith.constant 0 : index
    %c0_9 = arith.constant 0 : index
    %18 = vector.load %arg5[%c0_8, %c0_9] : memref<16x128xf32, #tpu.memory_space<vmem>>, vector<16x128xf32>
    tpu.vector_store %arg5[%c0_8, %c0_9], %17 {strides = array<i32>} : memref<16x128xf32, #tpu.memory_space<vmem>>, vector<16x128xf32>,
    %c0_i32_10 = arith.constant 0 : i32
    %19 = arith.cmpi eq, %arg1, %c0_i32_10 : i32
    %20 = arith.extui %19 : i1 to i32
    %c0_i32_11 = arith.constant 0 : i32
    %21 = arith.cmpi ne, %20, %c0_i32_11 : i32
    scf.if %21 {
      %c0_12 = arith.constant 0 : index
      %c0_13 = arith.constant 0 : index
      %22 = vector.load %arg5[%c0_12, %c0_13] : memref<16x128xf32, #tpu.memory_space<vmem>>, vector<16x128xf32>
      %c0_14 = arith.constant 0 : index
      %c0_15 = arith.constant 0 : index
      %23 = vector.load %arg4[%c0_14, %c0_15] : memref<16x128xf32, #tpu.memory_space<vmem>>, vector<16x128xf32>
      tpu.vector_store %arg4[%c0_14, %c0_15], %22 {strides = array<i32>} : memref<16x128xf32, #tpu.memory_space<vmem>>, vector<16x128xf32>,
    } else {
    }
    return
  }
  func.func @transform_0(%arg0: i32, %arg1: i32) -> (i32, i32) {
    %c1_i32 = arith.constant 1 : i32
    %0 = arith.muli %arg0, %c1_i32 : i32
    %1 = arith.addi %0, %arg1 : i32
    %c0_i32 = arith.constant 0 : i32
    %c0_i32_0 = arith.constant 0 : i32
    return %1, %c0_i32 : i32, i32
  }
  func.func @transform_1(%arg0: i32, %arg1: i32) -> (i32, i32) {
    %c1_i32 = arith.constant 1 : i32
    %0 = arith.muli %arg0, %c1_i32 : i32
    %1 = arith.addi %0, %arg1 : i32
    %c0_i32 = arith.constant 0 : i32
    %c0_i32_0 = arith.constant 0 : i32
    return %1, %c0_i32 : i32, i32
  }
  func.func @transform_2(%arg0: i32, %arg1: i32) -> (i32, i32) {
    %c0_i32 = arith.constant 0 : i32
    %c0_i32_0 = arith.constant 0 : i32
    return %arg0, %c0_i32 : i32, i32
  }
}

</mosaic_0001>

<llo_original>
// kernel: tpu_custom_call.1
$region0: #{tpu_custom_call.1}
  #allocation0 [shape = 'u32[]', space=smem, size = 0x4, offset = 0x4, fixed_abs, tag = 'smem constant byte address 0x4 - core index']
  #allocation1 [shape = 'u32[72,128]{1,0:T(1,128)}', space=vmem, size = 0x9000, scoped, tag = 'internal scratch']
  #allocation2 [shape = 'f32[16,128]{1,0:T(8,128)}', space=vmem, size = 0x2000, scoped, tag = 'scratch operand']
  %s0 = inlined_call_operand.hbm [shape: f32[16,128], index: 0, kind: input, shape index: {}]
  %s1 = inlined_call_operand.hbm [shape: f32[16,128], index: 1, kind: input, shape index: {}]
  %s2 = inlined_call_operand.hbm [shape: f32[16,128], index: 2, kind: output, shape index: {}]
  %s3 = sld [smem:[#allocation0]]
  $region34: #{tpu_custom_call.1} parent=0
    _
  %s5 = ssub.s32 1, %s3
  %s6 = scalar_select 0, %s5, %s3
  $region1: #{tpu_custom_call.1} parent=0
    #allocation3 [shape = 'u8[8192]{0}', space=vmem, size = 0x2000, scoped, tag = 'input window, operand 0, single buffered']
    #allocation4 [shape = 's32[1]{0}', space=sflag, size = 0x4, scoped, tag = 'scoped memory for tpu_custom_call.1']
    #allocation5 [shape = 's32[1]{0}', space=sflag, size = 0x4, scoped, tag = 'scoped memory for tpu_custom_call.1']
    #allocation6 [shape = 'u8[8192]{0}', space=vmem, size = 0x2000, scoped, tag = 'input window, operand 1, single buffered']
    #allocation7 [shape = 's32[1]{0}', space=sflag, size = 0x4, scoped, tag = 'scoped memory for tpu_custom_call.1']
    #allocation8 [shape = 'u8[8192]{0}', space=vmem, size = 0x2000, scoped, tag = 'output window, operand 0, single buffered']
    %7 = vsyncpa [#allocation4], 0
    %8 = vsyncpa [#allocation7], 0
    %9 = vsyncpa [#allocation5], 0
    // Predicated region
    $region2: #{tpu_custom_call.1} parent=1 // pred_check
      _
    $region3: #{tpu_custom_call.1} parent=1 // pred_check_branch
      %11 = sbr.rel (0) target = $region5
    $region4: #{tpu_custom_call.1} parent=1 // pred_region
      %s12 = sadd.s32 0, 0
      %s13 = smul.u32 2, %s12
      %15 = vsyncadd [#allocation4], 0
      %s16 = smul.addr %s13, 8
      %s17 = scalar_lea.hbm %s0, %s16
      %s18 = sshll.u32 %s17, 4
      %s19 = int_to_ptr.hbm [resolvable:$true] %s18
      %s20 = sshll.u32 [#allocation3], 4
      %s21 = int_to_ptr.vmem [resolvable:$true] %s20
      %26 = dma.hbm_to_vmem [thread:$0]  %s19, 256, %s21, [#allocation4], 128, 128, 8
    $region5: #{tpu_custom_call.1} parent=1 // pred_fallthru
      _
    // Predicated region
    $region6: #{tpu_custom_call.1} parent=1 // pred_check
      _
    $region7: #{tpu_custom_call.1} parent=1 // pred_check_branch
      %28 = sbr.rel (0) target = $region9
    $region8: #{tpu_custom_call.1} parent=1 // pred_region
      %s29 = sadd.s32 0, 0
      %s30 = smul.u32 2, %s29
      %32 = vsyncadd [#allocation7], 0
      %s33 = smul.addr %s30, 8
      %s34 = scalar_lea.hbm %s1, %s33
      %s35 = sshll.u32 %s34, 4
      %s36 = int_to_ptr.hbm [resolvable:$true] %s35
      %s37 = sshll.u32 [#allocation6], 4
      %s38 = int_to_ptr.vmem [resolvable:$true] %s37
      %43 = dma.hbm_to_vmem [thread:$0]  %s36, 256, %s38, [#allocation7], 128, 128, 8
    $region9: #{tpu_custom_call.1} parent=1 // pred_fallthru
      _
    // Predicated region
    $region10: #{tpu_custom_call.1} parent=1 // pred_check
      _
    $region11: #{tpu_custom_call.1} parent=1 // pred_check_branch
      %45 = sbr.rel (0) target = $region13
    $region12: #{tpu_custom_call.1} parent=1 // pred_region
      %47 = dma.done [#allocation4], 256
    $region13: #{tpu_custom_call.1} parent=1 // pred_fallthru
      _
    // Predicated region
    $region14: #{tpu_custom_call.1} parent=1 // pred_check
      _
    $region15: #{tpu_custom_call.1} parent=1 // pred_check_branch
      %49 = sbr.rel (0) target = $region17
    $region16: #{tpu_custom_call.1} parent=1 // pred_region
      %51 = dma.done [#allocation7], 256
    $region17: #{tpu_custom_call.1} parent=1 // pred_fallthru
      _
    %s52 = sadd.s32 0, 0
    %s53 = smul.u32 2, %s52
    %s54 = sadd.s32 0, 0
    %s55 = smul.u32 2, %s54
    %p56 = scmp.eq.s32.totalorder 0, 0
    // Predicated region
    $region18: #{tpu_custom_call.1} parent=1 // pred_check
      %p57 = pneg %p56
    $region19: #{tpu_custom_call.1} parent=1 // pred_check_branch
      %59 = sbr.rel (%p57) target = $region21
    $region20: #{tpu_custom_call.1} parent=1 // pred_region
      %60 = vst [vmem:[#allocation2] sm:$0xff] 0.0
      %61 = vst [vmem:[#allocation2 + $0x8] sm:$0xff] 0.0
    $region21: #{tpu_custom_call.1} parent=1 // pred_fallthru
      _
    %v62 = vld [vmem:[#allocation3] sm:$0xff]
    %v63 = vld [vmem:[#allocation3 + $0x8] sm:$0xff]
    %v64 = vld [vmem:[#allocation6] sm:$0xff]
    %v65 = vld [vmem:[#allocation6 + $0x8] sm:$0xff]
    %v66 = vsub.f32 %v64, %v62
    %v67 = vsub.f32 %v65, %v63
    %v68 = vand.u32 2147483647, %v66
    %v69 = vand.u32 2147483647, %v67
    %v70 = vmul.f32 %v68, -8.0
    %v71 = vmul.f32 %v69, -8.0
    %v72 = vmul.f32 %v70, 1.442695
    %v73 = vpow.pop %v72
    %v74 = vmul.f32 %v71, 1.442695
    %v75 = vpow.pop %v74
    %v76 = vsub.f32 1.0, %v73
    %v77 = vsub.f32 1.0, %v75
    %v78 = vmul.f32 %v68, %v68
    %v79 = vmul.f32 %v69, %v69
    %v80 = vmul.f32 %v76, %v78
    %v81 = vmul.f32 %v77, %v79
    %v82 = vld [vmem:[#allocation2] sm:$0xff]
    %v83 = vld [vmem:[#allocation2 + $0x8] sm:$0xff]
    %v84 = vadd.f32 %v80, 0.0
    %v85 = vadd.f32 %v81, 0.0
    %v86 = vadd.f32 %v82, %v84
    %v87 = vadd.f32 %v83, %v85
    %88 = vst [vmem:[#allocation2] sm:$0xff] %v86
    %89 = vst [vmem:[#allocation2 + $0x8] sm:$0xff] %v87
    // Predicated region
    $region22: #{tpu_custom_call.1} parent=1 // pred_check
      %p90 = pneg %p56
    $region23: #{tpu_custom_call.1} parent=1 // pred_check_branch
      %92 = sbr.rel (%p90) target = $region25
    $region24: #{tpu_custom_call.1} parent=1 // pred_region
      %v93 = vld [vmem:[#allocation2] sm:$0xff]
      %v94 = vld [vmem:[#allocation2 + $0x8] sm:$0xff]
      %95 = vst [vmem:[#allocation8] sm:$0xff] %v93
      %96 = vst [vmem:[#allocation8 + $0x8] sm:$0xff] %v94
    $region25: #{tpu_custom_call.1} parent=1 // pred_fallthru
      _
    // Predicated region
    $region26: #{tpu_custom_call.1} parent=1 // pred_check
      _
    $region27: #{tpu_custom_call.1} parent=1 // pred_check_branch
      %98 = sbr.rel (0) target = $region29
    $region28: #{tpu_custom_call.1} parent=1 // pred_region
      %100 = vsyncadd [#allocation5], 0
      %s101 = sshll.u32 [#allocation8], 4
      %s102 = int_to_ptr.vmem [resolvable:$true] %s101
      %s103 = sshll.u32 %s2, 4
      %s104 = int_to_ptr.hbm [resolvable:$true] %s103
      %109 = dma.vmem_to_hbm [thread:$0]  %s102, 256, %s104, [#allocation5], 128, 128, 8
    $region29: #{tpu_custom_call.1} parent=1 // pred_fallthru
      _
    // Predicated region
    $region30: #{tpu_custom_call.1} parent=1 // pred_check
      _
    $region31: #{tpu_custom_call.1} parent=1 // pred_check_branch
      %111 = sbr.rel (0) target = $region33
    $region32: #{tpu_custom_call.1} parent=1 // pred_region
      %113 = dma.done [#allocation5], 256
    $region33: #{tpu_custom_call.1} parent=1 // pred_fallthru
      _
    %114 = vsyncpa [#allocation4], 1
    %115 = vsyncpa [#allocation7], 1
    %116 = vsyncpa [#allocation5], 1

</llo_original>
